<compile_context>
chip_gen: v5e
topology: v5e:2x2
jax: 0.10.0
libtpu: 0.0.40
codegen_flags: <defaults>
</compile_context>

<pallas_src>
import functools

import jax
import jax.numpy as jnp
from jax import lax
from jax.experimental import pallas as pl
from jax.experimental.pallas import tpu as pltpu


def _round_up(x, m):
    return ((x + m - 1) // m) * m


def _get_loss_kernel(pred_ref, target_ref, trans_ref, out_ref, *,
                     mat_diff_loss_scale, batch_size):
    i = pl.program_id(0)

    pred = pred_ref[...]          # (blk_b, C) f32 log-probs
    target = target_ref[...]      # (blk_b, 1) i32 labels
    trans = trans_ref[...]        # (blk_b, K, K) bf16 (or f32)

    blk_b, C = pred.shape
    K = trans.shape[1]

    # Rows >= batch_size (partial last block) hold unspecified data -> mask.
    row_id = i * blk_b + lax.broadcasted_iota(jnp.int32, (blk_b, 1), 0)
    valid = row_id < batch_size                                        # (blk_b, 1)

    # ---- F.nll_loss(pred, target), per-row term ----------------------------
    cls_ids = lax.broadcasted_iota(jnp.int32, (blk_b, C), 1)           # (blk_b, C)
    picked = jnp.where(cls_ids == target, pred, 0.0)                   # (blk_b, C)
    nll_per = -jnp.sum(picked, axis=1, keepdims=True)                  # (blk_b, 1)

    # ---- feature_transform_regularizer --------------------------------------
    # gram_b = trans_b @ trans_b^T on the MXU (bf16 operands, f32 accumulation).
    gram = jnp.einsum("bij,bkj->bik", trans, trans,
                      preferred_element_type=jnp.float32)              # (blk_b, K, K)
    # Subtract the identity directly on the diagonal (numerically robust for
    # near-orthogonal trans, unlike sum(G^2) - 2*sum(A^2) + K).
    rows = lax.broadcasted_iota(jnp.int32, (blk_b, K, K), 1)
    cols = lax.broadcasted_iota(jnp.int32, (blk_b, K, K), 2)
    diff = jnp.where(rows == cols, gram - 1.0, gram)                   # G - I
    sq = jnp.sum(jnp.sum(diff * diff, axis=2), axis=1, keepdims=True)  # (blk_b, 1)
    fro_norms = jnp.sqrt(sq)                                           # (blk_b, 1)

    # mean(nll) + scale * mean(fro) == sum(nll + scale * fro) / B (wrapper div).
    combined = nll_per + jnp.float32(mat_diff_loss_scale) * fro_norms  # (blk_b, 1)
    out_ref[...] = jnp.where(valid, combined, 0.0)


def get_loss(pred, target, trans_feat, mat_diff_loss_scale=0.001,
             block_b=None, trans_dtype=jnp.bfloat16):
    """Pallas TPU implementation of pointnet_cls.get_loss.forward."""
    pred = pred.astype(jnp.float32)
    trans_feat = trans_feat.astype(trans_dtype)
    target2d = target.astype(jnp.int32).reshape(-1, 1)

    B, C = pred.shape
    K = trans_feat.shape[1]

    # Batch tile: multiple of 8 (sublane), default 128.  At K=64 in bf16 that is
    # 0.5 MiB per trans buffer (double-buffered), comfortably inside the default
    # scoped VMEM on v5e/v6e/v7x.
    if block_b is None:
        block_b = min(128, _round_up(B, 8))
    block_b = _round_up(block_b, 8)

    grid_n = pl.cdiv(B, block_b)
    out_rows = grid_n * block_b   # divides evenly; masked rows contribute 0

    kernel = functools.partial(_get_loss_kernel,
                               mat_diff_loss_scale=mat_diff_loss_scale,
                               batch_size=B)

    itemsize_t = jnp.dtype(trans_dtype).itemsize
    # Rough live-VMEM estimate: double-buffered inputs/outputs + f32 gram/diff.
    vmem_est = (2 * (block_b * C * 4 + block_b * 4 + block_b * K * K * itemsize_t
                     + block_b * 4)
                + 2 * block_b * K * K * 4)
    vmem_limit = None
    if vmem_est > 12 * 1024 * 1024:
        vmem_limit = int(min(2 * vmem_est, 48 * 1024 * 1024))

    cost = pl.CostEstimate(
        flops=2 * B * K * K * K + 4 * B * K * K + 3 * B * C,
        transcendentals=B,
        bytes_accessed=(4 * B * C + 4 * B + B * K * K * itemsize_t + 4 * out_rows),
    )

    partials = pl.pallas_call(
        kernel,
        out_shape=jax.ShapeDtypeStruct((out_rows, 1), jnp.float32),
        grid_spec=pltpu.PrefetchScalarGridSpec(
            num_scalar_prefetch=0,
            grid=(grid_n,),
            in_specs=[
                pl.BlockSpec((block_b, C), lambda i: (i, 0)),        # pred
                pl.BlockSpec((block_b, 1), lambda i: (i, 0)),        # target
                pl.BlockSpec((block_b, K, K), lambda i: (i, 0, 0)),  # trans_feat
            ],
            out_specs=pl.BlockSpec((block_b, 1), lambda i: (i, 0)),
        ),
        compiler_params=pltpu.CompilerParams(
            dimension_semantics=("parallel",),    # per-block outputs -> megacore OK
            vmem_limit_bytes=vmem_limit),
        cost_estimate=cost,
    )(pred, target2d, trans_feat)

    return jnp.sum(partials) / jnp.float32(B)


def _reference_loss(pred, target, trans_feat, mat_diff_loss_scale=0.001):
    """Pure-JAX reference mirroring the PyTorch semantics (f32)."""
    nll = -jnp.mean(pred[jnp.arange(pred.shape[0]), target])
    K = trans_feat.shape[1]
    gram = jnp.einsum("bij,bkj->bik", trans_feat, trans_feat)
    diff = gram - jnp.eye(K, dtype=jnp.float32)[None]
    norms = jnp.sqrt(jnp.sum(diff * diff, axis=(1, 2)))
    return nll + jnp.mean(norms) * mat_diff_loss_scale


def _make_inputs(key, B, C, K):
    k1, k2, k3 = jax.random.split(key, 3)
    logits = jax.random.normal(k1, (B, C), dtype=jnp.float32)
    pred = jax.nn.log_softmax(logits, axis=-1)
    target = jax.random.randint(k2, (B,), 0, C, dtype=jnp.int32)
    trans_feat = jax.random.normal(k3, (B, K, K), dtype=jnp.float32) * 0.1 \
        + jnp.eye(K, dtype=jnp.float32)[None]
    return pred, target, trans_feat


if __name__ == "__main__":
    key = jax.random.PRNGKey(0)
    k_a, k_b = jax.random.split(key)

    # Case 1: small PointNet-like shapes, single (partially masked) block,
    # f32 matmul path -> tight parity with the PyTorch-style reference.
    pred, target, trans_feat = _make_inputs(k_a, B=4, C=16, K=16)
    total = jax.block_until_ready(
        get_loss(pred, target, trans_feat, trans_dtype=jnp.float32))
    ref = _reference_loss(pred, target, trans_feat)
    assert jnp.allclose(total, ref, rtol=1e-5, atol=1e-5), (total, ref)

    # Case 2: non-divisible batch + forced small tile -> multi-step "parallel"
    # grid, in-kernel row masking, default bf16 MXU path (looser tolerance;
    # the regularizer is scaled by 1e-3 so bf16 is well within training needs).
    pred, target, trans_feat = _make_inputs(k_b, B=20, C=40, K=32)
    total = jax.block_until_ready(get_loss(pred, target, trans_feat, block_b=8))
    ref = _reference_loss(pred, target, trans_feat)
    assert jnp.allclose(total, ref, rtol=2e-3, atol=2e-3), (total, ref)

    print("KERNEL_OK")
</pallas_src>

<mosaic_0001>
module attributes {stable_mosaic.version = 11 : i64} {
  func.func @_get_loss_kernel(%arg0: i32, %arg1: memref<8x16xf32, #tpu.memory_space<vmem>>, %arg2: memref<8x1xi32, #tpu.memory_space<vmem>>, %arg3: memref<8x16x16xf32, #tpu.memory_space<vmem>>, %arg4: memref<8x1xf32, #tpu.memory_space<vmem>>) attributes {dimension_semantics = [#tpu.dimension_semantics<parallel>], iteration_bounds = array<i64: 1>, scalar_prefetch = 0 : i64, scratch_operands = 0 : i64, tpu.core_type = #tpu.core_type<tc>, window_params = [{transform_indices = @transform_0, window_bounds = array<i64: 8, 16>}, {transform_indices = @transform_1, window_bounds = array<i64: 8, 1>}, {transform_indices = @transform_2, window_bounds = array<i64: 8, 16, 16>}, {transform_indices = @transform_3, window_bounds = array<i64: 8, 1>}]} {
    %c0 = arith.constant 0 : index
    %c0_0 = arith.constant 0 : index
    %0 = vector.load %arg1[%c0, %c0_0] : memref<8x16xf32, #tpu.memory_space<vmem>>, vector<8x16xf32>
    %c0_1 = arith.constant 0 : index
    %c0_2 = arith.constant 0 : index
    %1 = vector.load %arg2[%c0_1, %c0_2] : memref<8x1xi32, #tpu.memory_space<vmem>>, vector<8x1xi32>
    %c0_3 = arith.constant 0 : index
    %c0_4 = arith.constant 0 : index
    %c0_5 = arith.constant 0 : index
    %2 = vector.load %arg3[%c0_3, %c0_4, %c0_5] : memref<8x16x16xf32, #tpu.memory_space<vmem>>, vector<8x16x16xf32>
    %c8_i32 = arith.constant 8 : i32
    %3 = arith.muli %arg0, %c8_i32 : i32
    %4 = tpu.iota {dimensions = array<i32: 0>} : vector<8x1xi32>
    %5 = vector.broadcast %3 : i32 to vector<8x1xi32>
    %6 = arith.addi %5, %4 : vector<8x1xi32>
    %c4_i32 = arith.constant 4 : i32
    %7 = vector.broadcast %c4_i32 : i32 to vector<8x1xi32>
    %8 = arith.cmpi slt, %6, %7 : vector<8x1xi32>
    %9 = tpu.iota {dimensions = array<i32: 1>} : vector<8x16xi32>
    %10 = vector.broadcast %1 : vector<8x1xi32> to vector<8x16xi32>
    %11 = arith.cmpi eq, %9, %10 : vector<8x16xi32>
    %cst = arith.constant 0.000000e+00 : f32
    %12 = vector.broadcast %cst : f32 to vector<8x16xf32>
    %13 = arith.select %11, %0, %12 : vector<8x16xi1>, vector<8x16xf32>
    %cst_6 = arith.constant dense<0.000000e+00> : vector<8xf32>
    %14 = vector.multi_reduction <add>, %13, %cst_6 [1] : vector<8x16xf32> to vector<8xf32>
    %15 = vector.shape_cast %14 : vector<8xf32> to vector<8x1xf32>
    %cst_7 = arith.constant 0.000000e+00 : f32
    %16 = vector.broadcast %cst_7 : f32 to vector<8x1xf32>
    %17 = arith.subf %16, %15 : vector<8x1xf32>
    "tpu.trace_start"() <{level = 10 : i32, message = "bij,bkj->bik"}> : () -> ()
    %cst_8 = arith.constant dense<0.000000e+00> : vector<8x16x16xf32>
    %18 = tpu.matmul %2, %2, %cst_8 {dimension_numbers = #tpu.dot_dimension_numbers<[2], [2], [1], [1], [0, 0, 0, 1, 1, 1], [0], [0]>} : vector<8x16x16xf32>, vector<8x16x16xf32>, vector<8x16x16xf32> -> vector<8x16x16xf32>
    "tpu.trace_stop"() : () -> ()
    %19 = tpu.iota {dimensions = array<i32: 1>} : vector<8x16x16xi32>
    %20 = tpu.iota {dimensions = array<i32: 2>} : vector<8x16x16xi32>
    %21 = arith.cmpi eq, %19, %20 : vector<8x16x16xi32>
    %cst_9 = arith.constant 1.000000e+00 : f32
    %22 = vector.broadcast %cst_9 : f32 to vector<8x16x16xf32>
    %23 = arith.subf %18, %22 : vector<8x16x16xf32>
    %24 = arith.select %21, %23, %18 : vector<8x16x16xi1>, vector<8x16x16xf32>
    %25 = arith.mulf %24, %24 : vector<8x16x16xf32>
    %cst_10 = arith.constant dense<0.000000e+00> : vector<8x16xf32>
    %26 = vector.multi_reduction <add>, %25, %cst_10 [2] : vector<8x16x16xf32> to vector<8x16xf32>
    %cst_11 = arith.constant dense<0.000000e+00> : vector<8xf32>
    %27 = vector.multi_reduction <add>, %26, %cst_11 [1] : vector<8x16xf32> to vector<8xf32>
    %28 = vector.shape_cast %27 : vector<8xf32> to vector<8x1xf32>
    %29 = math.sqrt %28 : vector<8x1xf32>
    %cst_12 = arith.constant 1.000000e-03 : f32
    %30 = vector.broadcast %cst_12 : f32 to vector<8x1xf32>
    %31 = arith.mulf %30, %29 : vector<8x1xf32>
    %32 = arith.addf %17, %31 : vector<8x1xf32>
    %cst_13 = arith.constant 0.000000e+00 : f32
    %33 = vector.broadcast %cst_13 : f32 to vector<8x1xf32>
    %34 = arith.select %8, %32, %33 : vector<8x1xi1>, vector<8x1xf32>
    %c0_14 = arith.constant 0 : index
    %c0_15 = arith.constant 0 : index
    %35 = vector.load %arg4[%c0_14, %c0_15] : memref<8x1xf32, #tpu.memory_space<vmem>>, vector<8x1xf32>
    tpu.vector_store %arg4[%c0_14, %c0_15], %34 {strides = array<i32>} : memref<8x1xf32, #tpu.memory_space<vmem>>, vector<8x1xf32>,
    return
  }
  func.func @transform_0(%arg0: i32) -> (i32, i32) {
    %c0_i32 = arith.constant 0 : i32
    %c0_i32_0 = arith.constant 0 : i32
    return %arg0, %c0_i32 : i32, i32
  }
  func.func @transform_1(%arg0: i32) -> (i32, i32) {
    %c0_i32 = arith.constant 0 : i32
    %c0_i32_0 = arith.constant 0 : i32
    return %arg0, %c0_i32 : i32, i32
  }
  func.func @transform_2(%arg0: i32) -> (i32, i32, i32) {
    %c0_i32 = arith.constant 0 : i32
    %c0_i32_0 = arith.constant 0 : i32
    %c0_i32_1 = arith.constant 0 : i32
    return %arg0, %c0_i32, %c0_i32_0 : i32, i32, i32
  }
  func.func @transform_3(%arg0: i32) -> (i32, i32) {
    %c0_i32 = arith.constant 0 : i32
    %c0_i32_0 = arith.constant 0 : i32
    return %arg0, %c0_i32 : i32, i32
  }
}

</mosaic_0001>

<llo_original>
// kernel: tpu_custom_call.1
$region0: #{tpu_custom_call.1}
  #allocation0 [shape = 'u32[]', space=smem, size = 0x4, offset = 0x4, fixed_abs, tag = 'smem constant byte address 0x4 - core index']
  #allocation1 [shape = 'u32[72,128]{1,0:T(1,128)}', space=vmem, size = 0x9000, scoped, tag = 'internal scratch']
  %s0 = inlined_call_operand.vmem [shape: f32[4,16], index: 0, kind: input, shape index: {}]
  %s1 = inlined_call_operand.vmem [shape: s32[4,1], index: 1, kind: input, shape index: {}]
  %s2 = inlined_call_operand.hbm [shape: f32[4,16,16], index: 2, kind: input, shape index: {}]
  %s3 = inlined_call_operand.vmem [shape: f32[8,1], index: 3, kind: output, shape index: {}]
  %s4 = sld [smem:[#allocation0]]
  $region26: #{tpu_custom_call.1} parent=0
    _
  %s6 = ssub.s32 1, %s4
  %s7 = scalar_select 0, %s6, %s4
  $region1: #{tpu_custom_call.1} parent=0
    #allocation2 [shape = 'u8[65536]{0}', space=vmem, size = 0x10000, scoped, tag = 'input window, operand 2, single buffered']
    #allocation3 [shape = 's32[1]{0}', space=sflag, size = 0x4, scoped, tag = 'scoped memory for tpu_custom_call.1']
    %8 = vsyncpa [#allocation3], 0
    // Predicated region
    $region2: #{tpu_custom_call.1} parent=1 // pred_check
      _
    $region3: #{tpu_custom_call.1} parent=1 // pred_check_branch
      %10 = sbr.rel (0) target = $region5
    $region4: #{tpu_custom_call.1} parent=1 // pred_region
      _
    $region5: #{tpu_custom_call.1} parent=1 // pred_fallthru
      _
    // Predicated region
    $region6: #{tpu_custom_call.1} parent=1 // pred_check
      _
    $region7: #{tpu_custom_call.1} parent=1 // pred_check_branch
      %12 = sbr.rel (0) target = $region9
    $region8: #{tpu_custom_call.1} parent=1 // pred_region
      _
    $region9: #{tpu_custom_call.1} parent=1 // pred_fallthru
      _
    // Predicated region
    $region10: #{tpu_custom_call.1} parent=1 // pred_check
      _
    $region11: #{tpu_custom_call.1} parent=1 // pred_check_branch
      %14 = sbr.rel (0) target = $region13
    $region12: #{tpu_custom_call.1} parent=1 // pred_region
      %16 = vsyncadd [#allocation3], 1024
      %s17 = sshll.u32 %s2, 4
      %s18 = int_to_ptr.hbm [resolvable:$true] %s17
      %s19 = sshll.u32 [#allocation2], 4
      %s20 = int_to_ptr.vmem [resolvable:$true] %s19
      %25 = dma.hbm_to_vmem [thread:$0]  %s18, 1024, %s20, [#allocation3], 128, 128, 8
    $region13: #{tpu_custom_call.1} parent=1 // pred_fallthru
      _
    // Predicated region
    $region14: #{tpu_custom_call.1} parent=1 // pred_check
      _
    $region15: #{tpu_custom_call.1} parent=1 // pred_check_branch
      %27 = sbr.rel (0) target = $region17
    $region16: #{tpu_custom_call.1} parent=1 // pred_region
      %29 = dma.done [#allocation3], 2048
    $region17: #{tpu_custom_call.1} parent=1 // pred_fallthru
      _
    %v30 = vld [vmem:[%s0] sm:$0xff]
    %v31 = vld [vmem:[%s1] sm:$0xff]
    %v32 = vld [vmem:[#allocation2] sm:$0xff]
    %v33 = vld [vmem:[#allocation2 + $0x8] sm:$0xff]
    %v34 = vld [vmem:[#allocation2 + $0x10] sm:$0xff]
    %v35 = vld [vmem:[#allocation2 + $0x18] sm:$0xff]
    %v36 = vld [vmem:[#allocation2 + $0x20] sm:$0xff]
    %v37 = vld [vmem:[#allocation2 + $0x28] sm:$0xff]
    %v38 = vld [vmem:[#allocation2 + $0x30] sm:$0xff]
    %v39 = vld [vmem:[#allocation2 + $0x38] sm:$0xff]
    %v40 = vld [vmem:[#allocation2 + $0x40] sm:$0xff]
    %v41 = vld [vmem:[#allocation2 + $0x48] sm:$0xff]
    %v42 = vld [vmem:[#allocation2 + $0x50] sm:$0xff]
    %v43 = vld [vmem:[#allocation2 + $0x58] sm:$0xff]
    %v44 = vld [vmem:[#allocation2 + $0x60] sm:$0xff]
    %v45 = vld [vmem:[#allocation2 + $0x68] sm:$0xff]
    %v46 = vld [vmem:[#allocation2 + $0x70] sm:$0xff]
    %v47 = vld [vmem:[#allocation2 + $0x78] sm:$0xff]
    %s48 = smul.u32 0, 8
    %v49 = vlaneseq
    %v50 = vshrl.u32 %v49, 7
    %v51 = vstv %s48
    %v52 = vadd.s32 %v51, %v50
    %vm53 = vcmp.lt.s32.totalorder %v52, 4
    %v54 = vlaneseq
    %v55 = vand.u32 %v54, 127
    %56 = vset.pattern.permute.xlu0 0
    %57 = vperm.xlu0 %56, %v31
    %v58 = vpop.permute.xlu0 %57
    %vm59 = vcmp.eq.s32.totalorder %v55, %v58
    %v60 = vsel %vm59, %v30, 0.0
    %vm61 = vcmask 130048
    %v62 = vsel %vm61, %v60, 0.0
    %63 = vadd.xlane.f32.xlu0 %v62
    %v64 = vpop.xlane.xlu0 %63
    %v65 = vsub.f32 0.0, %v64
    %v67 = vsel %vm61, %v32, 0
    %v70 = vsel %vm61, %v33, 0
    %72 = vmatpush.xpose.msra.mxu0 0.0
    %73 = vmatpush.xpose.msra.mxu0 0.0
    %74 = vmatpush.xpose.msra.mxu0 0.0
    %75 = vmatpush.xpose.msra.mxu0 0.0
    %76 = vmatpush.xpose.msra.mxu0 0.0
    %77 = vmatpush.xpose.msra.mxu0 0.0
    %78 = vmatpush.xpose.msra.mxu0 0.0
    %79 = vmatpush.xpose.msra.mxu0 0.0
    %80 = vmatpush.xpose.msra.mxu0 0.0
    %81 = vmatpush.xpose.msra.mxu0 0.0
    %82 = vmatpush.xpose.msra.mxu0 0.0
    %83 = vmatpush.xpose.msra.mxu0 0.0
    %84 = vmatpush.xpose.msra.mxu0 0.0
    %85 = vmatpush.xpose.msra.mxu0 0.0
    %86 = vmatpush.xpose.msra.mxu0 %v70
    %87 = vmatpush.xpose.msra.mxu0 %v67
    %88 = vmatmul.f32.gmra.mxu0 %v67
    %v89 = vpop.f32.mrf.mxu0
    %v90 = vadd.f32 0.0, %v89
    %91 = vmatmul.f32.gmra.mxu0 %v70
    %v92 = vpop.f32.mrf.mxu0
    %v93 = vadd.f32 0.0, %v92
    %94 = vdwg.mxu0
    %v96 = vsel %vm61, %v34, 0
    %v99 = vsel %vm61, %v35, 0
    %101 = vmatpush.xpose.msra.mxu0 0.0
    %102 = vmatpush.xpose.msra.mxu0 0.0
    %103 = vmatpush.xpose.msra.mxu0 0.0
    %104 = vmatpush.xpose.msra.mxu0 0.0
    %105 = vmatpush.xpose.msra.mxu0 0.0
    %106 = vmatpush.xpose.msra.mxu0 0.0
    %107 = vmatpush.xpose.msra.mxu0 0.0
    %108 = vmatpush.xpose.msra.mxu0 0.0
    %109 = vmatpush.xpose.msra.mxu0 0.0
    %110 = vmatpush.xpose.msra.mxu0 0.0
    %111 = vmatpush.xpose.msra.mxu0 0.0
    %112 = vmatpush.xpose.msra.mxu0 0.0
    %113 = vmatpush.xpose.msra.mxu0 0.0
    %114 = vmatpush.xpose.msra.mxu0 0.0
    %115 = vmatpush.xpose.msra.mxu0 %v99
    %116 = vmatpush.xpose.msra.mxu0 %v96
    %117 = vmatmul.f32.gmra.mxu0 %v96
    %v118 = vpop.f32.mrf.mxu0
    %v119 = vadd.f32 0.0, %v118
    %120 = vmatmul.f32.gmra.mxu0 %v99
    %v121 = vpop.f32.mrf.mxu0
    %v122 = vadd.f32 0.0, %v121
    %123 = vdwg.mxu0
    %v125 = vsel %vm61, %v36, 0
    %v128 = vsel %vm61, %v37, 0
    %130 = vmatpush.xpose.msra.mxu0 0.0
    %131 = vmatpush.xpose.msra.mxu0 0.0
    %132 = vmatpush.xpose.msra.mxu0 0.0
    %133 = vmatpush.xpose.msra.mxu0 0.0
    %134 = vmatpush.xpose.msra.mxu0 0.0
    %135 = vmatpush.xpose.msra.mxu0 0.0
    %136 = vmatpush.xpose.msra.mxu0 0.0
    %137 = vmatpush.xpose.msra.mxu0 0.0
    %138 = vmatpush.xpose.msra.mxu0 0.0
    %139 = vmatpush.xpose.msra.mxu0 0.0
    %140 = vmatpush.xpose.msra.mxu0 0.0
    %141 = vmatpush.xpose.msra.mxu0 0.0
    %142 = vmatpush.xpose.msra.mxu0 0.0
    %143 = vmatpush.xpose.msra.mxu0 0.0
    %144 = vmatpush.xpose.msra.mxu0 %v128
    %145 = vmatpush.xpose.msra.mxu0 %v125
    %146 = vmatmul.f32.gmra.mxu0 %v125
    %v147 = vpop.f32.mrf.mxu0
    %v148 = vadd.f32 0.0, %v147
    %149 = vmatmul.f32.gmra.mxu0 %v128
    %v150 = vpop.f32.mrf.mxu0
    %v151 = vadd.f32 0.0, %v150
    %152 = vdwg.mxu0
    %v154 = vsel %vm61, %v38, 0
    %v157 = vsel %vm61, %v39, 0
    %159 = vmatpush.xpose.msra.mxu0 0.0
    %160 = vmatpush.xpose.msra.mxu0 0.0
    %161 = vmatpush.xpose.msra.mxu0 0.0
    %162 = vmatpush.xpose.msra.mxu0 0.0
    %163 = vmatpush.xpose.msra.mxu0 0.0
    %164 = vmatpush.xpose.msra.mxu0 0.0
    %165 = vmatpush.xpose.msra.mxu0 0.0
    %166 = vmatpush.xpose.msra.mxu0 0.0
    %167 = vmatpush.xpose.msra.mxu0 0.0
    %168 = vmatpush.xpose.msra.mxu0 0.0
    %169 = vmatpush.xpose.msra.mxu0 0.0
    %170 = vmatpush.xpose.msra.mxu0 0.0
    %171 = vmatpush.xpose.msra.mxu0 0.0
    %172 = vmatpush.xpose.msra.mxu0 0.0
    %173 = vmatpush.xpose.msra.mxu0 %v157
    %174 = vmatpush.xpose.msra.mxu0 %v154
    %175 = vmatmul.f32.gmra.mxu0 %v154
    %v176 = vpop.f32.mrf.mxu0
    %v177 = vadd.f32 0.0, %v176
    %178 = vmatmul.f32.gmra.mxu0 %v157
    %v179 = vpop.f32.mrf.mxu0
    %v180 = vadd.f32 0.0, %v179
    %181 = vdwg.mxu0
    %v183 = vsel %vm61, %v40, 0
    %v186 = vsel %vm61, %v41, 0
    %188 = vmatpush.xpose.msra.mxu0 0.0
    %189 = vmatpush.xpose.msra.mxu0 0.0
    %190 = vmatpush.xpose.msra.mxu0 0.0
    %191 = vmatpush.xpose.msra.mxu0 0.0
    %192 = vmatpush.xpose.msra.mxu0 0.0
    %193 = vmatpush.xpose.msra.mxu0 0.0
    %194 = vmatpush.xpose.msra.mxu0 0.0
    %195 = vmatpush.xpose.msra.mxu0 0.0
    %196 = vmatpush.xpose.msra.mxu0 0.0
    %197 = vmatpush.xpose.msra.mxu0 0.0
    %198 = vmatpush.xpose.msra.mxu0 0.0
    %199 = vmatpush.xpose.msra.mxu0 0.0
    %200 = vmatpush.xpose.msra.mxu0 0.0
    %201 = vmatpush.xpose.msra.mxu0 0.0
    %202 = vmatpush.xpose.msra.mxu0 %v186
    %203 = vmatpush.xpose.msra.mxu0 %v183
    %204 = vmatmul.f32.gmra.mxu0 %v183
    %v205 = vpop.f32.mrf.mxu0
    %v206 = vadd.f32 0.0, %v205
    %207 = vmatmul.f32.gmra.mxu0 %v186
    %v208 = vpop.f32.mrf.mxu0
    %v209 = vadd.f32 0.0, %v208
    %210 = vdwg.mxu0
    %v212 = vsel %vm61, %v42, 0
    %v215 = vsel %vm61, %v43, 0
    %217 = vmatpush.xpose.msra.mxu0 0.0
    %218 = vmatpush.xpose.msra.mxu0 0.0
    %219 = vmatpush.xpose.msra.mxu0 0.0
    %220 = vmatpush.xpose.msra.mxu0 0.0
    %221 = vmatpush.xpose.msra.mxu0 0.0
    %222 = vmatpush.xpose.msra.mxu0 0.0
    %223 = vmatpush.xpose.msra.mxu0 0.0
    %224 = vmatpush.xpose.msra.mxu0 0.0
    %225 = vmatpush.xpose.msra.mxu0 0.0
    %226 = vmatpush.xpose.msra.mxu0 0.0
    %227 = vmatpush.xpose.msra.mxu0 0.0
    %228 = vmatpush.xpose.msra.mxu0 0.0
    %229 = vmatpush.xpose.msra.mxu0 0.0
    %230 = vmatpush.xpose.msra.mxu0 0.0
    %231 = vmatpush.xpose.msra.mxu0 %v215
    %232 = vmatpush.xpose.msra.mxu0 %v212
    %233 = vmatmul.f32.gmra.mxu0 %v212
    %v234 = vpop.f32.mrf.mxu0
    %v235 = vadd.f32 0.0, %v234
    %236 = vmatmul.f32.gmra.mxu0 %v215
    %v237 = vpop.f32.mrf.mxu0
    %v238 = vadd.f32 0.0, %v237
    %239 = vdwg.mxu0
    %v241 = vsel %vm61, %v44, 0
    %v244 = vsel %vm61, %v45, 0
    %246 = vmatpush.xpose.msra.mxu0 0.0
    %247 = vmatpush.xpose.msra.mxu0 0.0
    %248 = vmatpush.xpose.msra.mxu0 0.0
    %249 = vmatpush.xpose.msra.mxu0 0.0
    %250 = vmatpush.xpose.msra.mxu0 0.0
    %251 = vmatpush.xpose.msra.mxu0 0.0
    %252 = vmatpush.xpose.msra.mxu0 0.0
    %253 = vmatpush.xpose.msra.mxu0 0.0
    %254 = vmatpush.xpose.msra.mxu0 0.0
    %255 = vmatpush.xpose.msra.mxu0 0.0
    %256 = vmatpush.xpose.msra.mxu0 0.0
    %257 = vmatpush.xpose.msra.mxu0 0.0
    %258 = vmatpush.xpose.msra.mxu0 0.0
    %259 = vmatpush.xpose.msra.mxu0 0.0
    %260 = vmatpush.xpose.msra.mxu0 %v244
    %261 = vmatpush.xpose.msra.mxu0 %v241
    %262 = vmatmul.f32.gmra.mxu0 %v241
    %v263 = vpop.f32.mrf.mxu0
    %v264 = vadd.f32 0.0, %v263
    %265 = vmatmul.f32.gmra.mxu0 %v244
    %v266 = vpop.f32.mrf.mxu0
    %v267 = vadd.f32 0.0, %v266
    %268 = vdwg.mxu0
    %v270 = vsel %vm61, %v46, 0
    %v273 = vsel %vm61, %v47, 0
    %275 = vmatpush.xpose.msra.mxu0 0.0
    %276 = vmatpush.xpose.msra.mxu0 0.0
    %277 = vmatpush.xpose.msra.mxu0 0.0
    %278 = vmatpush.xpose.msra.mxu0 0.0
    %279 = vmatpush.xpose.msra.mxu0 0.0
    %280 = vmatpush.xpose.msra.mxu0 0.0
    %281 = vmatpush.xpose.msra.mxu0 0.0
    %282 = vmatpush.xpose.msra.mxu0 0.0
    %283 = vmatpush.xpose.msra.mxu0 0.0
    %284 = vmatpush.xpose.msra.mxu0 0.0
    %285 = vmatpush.xpose.msra.mxu0 0.0
    %286 = vmatpush.xpose.msra.mxu0 0.0
    %287 = vmatpush.xpose.msra.mxu0 0.0
    %288 = vmatpush.xpose.msra.mxu0 0.0
    %289 = vmatpush.xpose.msra.mxu0 %v273
    %290 = vmatpush.xpose.msra.mxu0 %v270
    %291 = vmatmul.f32.gmra.mxu0 %v270
    %v292 = vpop.f32.mrf.mxu0
    %v293 = vadd.f32 0.0, %v292
    %294 = vmatmul.f32.gmra.mxu0 %v273
    %v295 = vpop.f32.mrf.mxu0
    %v296 = vadd.f32 0.0, %v295
    %297 = vdwg.mxu0
    %v298 = vadd.s32 %v50, 8
    %vm299 = vcmp.eq.s32.totalorder %v50, %v55
    %vm300 = vcmp.eq.s32.totalorder %v298, %v55
    %v301 = vsub.f32 %v90, 1.0
    %v302 = vsub.f32 %v93, 1.0
    %v303 = vsub.f32 %v119, 1.0
    %v304 = vsub.f32 %v122, 1.0
    %v305 = vsub.f32 %v148, 1.0
    %v306 = vsub.f32 %v151, 1.0
    %v307 = vsub.f32 %v177, 1.0
    %v308 = vsub.f32 %v180, 1.0
    %v309 = vsub.f32 %v206, 1.0
    %v310 = vsub.f32 %v209, 1.0
    %v311 = vsub.f32 %v235, 1.0
    %v312 = vsub.f32 %v238, 1.0
    %v313 = vsub.f32 %v264, 1.0
    %v314 = vsub.f32 %v267, 1.0
    %v315 = vsub.f32 %v293, 1.0
    %v316 = vsub.f32 %v296, 1.0
    %v317 = vsel %vm299, %v301, %v90
    %v318 = vsel %vm300, %v302, %v93
    %v319 = vsel %vm299, %v303, %v119
    %v320 = vsel %vm300, %v304, %v122
    %v321 = vsel %vm299, %v305, %v148
    %v322 = vsel %vm300, %v306, %v151
    %v323 = vsel %vm299, %v307, %v177
    %v324 = vsel %vm300, %v308, %v180
    %v325 = vsel %vm299, %v309, %v206
    %v326 = vsel %vm300, %v310, %v209
    %v327 = vsel %vm299, %v311, %v235
    %v328 = vsel %vm300, %v312, %v238
    %v329 = vsel %vm299, %v313, %v264
    %v330 = vsel %vm300, %v314, %v267
    %v331 = vsel %vm299, %v315, %v293
    %v332 = vsel %vm300, %v316, %v296
    %v333 = vmul.f32 %v317, %v317
    %v334 = vmul.f32 %v318, %v318
    %v335 = vmul.f32 %v319, %v319
    %v336 = vmul.f32 %v320, %v320
    %v337 = vmul.f32 %v321, %v321
    %v338 = vmul.f32 %v322, %v322
    %v339 = vmul.f32 %v323, %v323
    %v340 = vmul.f32 %v324, %v324
    %v341 = vmul.f32 %v325, %v325
    %v342 = vmul.f32 %v326, %v326
    %v343 = vmul.f32 %v327, %v327
    %v344 = vmul.f32 %v328, %v328
    %v345 = vmul.f32 %v329, %v329
    %v346 = vmul.f32 %v330, %v330
    %v347 = vmul.f32 %v331, %v331
    %v348 = vmul.f32 %v332, %v332
    %v349 = vsel %vm61, %v333, 0.0
    %350 = vadd.xlane.f32.xlu0 %v349
    %v351 = vpop.xlane.xlu0 %350
    %v352 = vsel %vm61, %v334, 0.0
    %353 = vadd.xlane.f32.xlu0 %v352
    %v354 = vpop.xlane.xlu0 %353
    %v355 = vsel %vm61, %v335, 0.0
    %356 = vadd.xlane.f32.xlu0 %v355
    %v357 = vpop.xlane.xlu0 %356
    %v358 = vsel %vm61, %v336, 0.0
    %359 = vadd.xlane.f32.xlu0 %v358
    %v360 = vpop.xlane.xlu0 %359
    %v361 = vsel %vm61, %v337, 0.0
    %362 = vadd.xlane.f32.xlu0 %v361
    %v363 = vpop.xlane.xlu0 %362
    %v364 = vsel %vm61, %v338, 0.0
    %365 = vadd.xlane.f32.xlu0 %v364
    %v366 = vpop.xlane.xlu0 %365
    %v367 = vsel %vm61, %v339, 0.0
    %368 = vadd.xlane.f32.xlu0 %v367
    %v369 = vpop.xlane.xlu0 %368
    %v370 = vsel %vm61, %v340, 0.0
    %371 = vadd.xlane.f32.xlu0 %v370
    %v372 = vpop.xlane.xlu0 %371
    %v373 = vsel %vm61, %v341, 0.0
    %374 = vadd.xlane.f32.xlu0 %v373
    %v375 = vpop.xlane.xlu0 %374
    %v376 = vsel %vm61, %v342, 0.0
    %377 = vadd.xlane.f32.xlu0 %v376
    %v378 = vpop.xlane.xlu0 %377
    %v379 = vsel %vm61, %v343, 0.0
    %380 = vadd.xlane.f32.xlu0 %v379
    %v381 = vpop.xlane.xlu0 %380
    %v382 = vsel %vm61, %v344, 0.0
    %383 = vadd.xlane.f32.xlu0 %v382
    %v384 = vpop.xlane.xlu0 %383
    %v385 = vsel %vm61, %v345, 0.0
    %386 = vadd.xlane.f32.xlu0 %v385
    %v387 = vpop.xlane.xlu0 %386
    %v388 = vsel %vm61, %v346, 0.0
    %389 = vadd.xlane.f32.xlu0 %v388
    %v390 = vpop.xlane.xlu0 %389
    %v391 = vsel %vm61, %v347, 0.0
    %392 = vadd.xlane.f32.xlu0 %v391
    %v393 = vpop.xlane.xlu0 %392
    %v394 = vsel %vm61, %v348, 0.0
    %395 = vadd.xlane.f32.xlu0 %v394
    %v396 = vpop.xlane.xlu0 %395
    %v413 = vperm.slane %v351, %v55
    %v414 = vadd.s32 %v55, 4294967288
    %v415 = vperm.slane %v354, %v414
    %vm416 = vcmask 130112
    %v417 = vsel %vm416, %v415, %v413
    %v418 = vperm.slane %v357, %v55
    %v419 = vperm.slane %v360, %v414
    %v420 = vsel %vm416, %v419, %v418
    %v421 = vperm.slane %v363, %v55
    %v422 = vperm.slane %v366, %v414
    %v423 = vsel %vm416, %v422, %v421
    %v424 = vperm.slane %v369, %v55
    %v425 = vperm.slane %v372, %v414
    %v426 = vsel %vm416, %v425, %v424
    %v427 = vperm.slane %v375, %v55
    %v428 = vperm.slane %v378, %v414
    %v429 = vsel %vm416, %v428, %v427
    %v430 = vperm.slane %v381, %v55
    %v431 = vperm.slane %v384, %v414
    %v432 = vsel %vm416, %v431, %v430
    %v433 = vperm.slane %v387, %v55
    %v434 = vperm.slane %v390, %v414
    %v435 = vsel %vm416, %v434, %v433
    %v436 = vperm.slane %v393, %v55
    %v437 = vperm.slane %v396, %v414
    %v438 = vsel %vm416, %v437, %v436
    %vm439 = vcmask 1041409
    %v440 = vsel %vm439, %v420, %v417
    %vm441 = vcmask 1042434
    %v442 = vsel %vm441, %v423, %v440
    %vm443 = vcmask 1043459
    %v444 = vsel %vm443, %v426, %v442
    %vm445 = vcmask 1044484
    %v446 = vsel %vm445, %v429, %v444
    %vm447 = vcmask 1045509
    %v448 = vsel %vm447, %v432, %v446
    %vm449 = vcmask 1046534
    %v450 = vsel %vm449, %v435, %v448
    %vm451 = vcmask 1047559
    %v452 = vsel %vm451, %v438, %v450
    %v454 = vsel %vm61, %v452, 0.0
    %455 = vadd.xlane.f32.xlu0 %v454
    %v456 = vpop.xlane.xlu0 %455
    %v457 = vrsqrt.pop %v456
    %v458 = vmul.f32 %v457, %v456
    %v459 = vmul.f32 %v458, %v457
    %v460 = vmul.f32 0.5, %v459
    %v461 = vsub.f32 1.5, %v460
    %v462 = vmul.f32 %v457, %v461
    %v463 = vmul.f32 %v456, %v462
    %vm464 = vcmp.eq.f32.partialorder %v456, inf
    %v465 = vsel %vm464, %v456, %v463
    %vm466 = vcmp.eq.f32.partialorder %v456, 0.0
    %v467 = vand.u32 %v456, 2147483648
    %v468 = vsel %vm466, %v467, %v465
    %v469 = vmul.f32 %v468, 0.001
    %v470 = vadd.f32 %v65, %v469
    %v471 = vsel %vm53, %v470, 0.0
    %vm472 = vcmask 7168
    %473 = vst.msk [vmem:[%s3] sm:$0xff] %vm472, %v471
    // Predicated region
    $region18: #{tpu_custom_call.1} parent=1 // pred_check
      _
    $region19: #{tpu_custom_call.1} parent=1 // pred_check_branch
      %475 = sbr.rel (0) target = $region21
    $region20: #{tpu_custom_call.1} parent=1 // pred_region
      _
    $region21: #{tpu_custom_call.1} parent=1 // pred_fallthru
      _
    // Predicated region
    $region22: #{tpu_custom_call.1} parent=1 // pred_check
      _
    $region23: #{tpu_custom_call.1} parent=1 // pred_check_branch
      %477 = sbr.rel (0) target = $region25
    $region24: #{tpu_custom_call.1} parent=1 // pred_region
      _
    $region25: #{tpu_custom_call.1} parent=1 // pred_fallthru
      _
    %478 = vsyncpa [#allocation3], 1

</llo_original>
